<compile_context>
chip_gen: v7x
topology: tpu7x:2x2x1
jax: 0.10.0
libtpu: 0.0.40
codegen_flags: <defaults>
</compile_context>

<pallas_src>
import functools

import jax
import jax.numpy as jnp
from jax.experimental import pallas as pl
from jax.experimental.pallas import tpu as pltpu


# ----------------------------- Pallas kernels -------------------------------

def _ca_fused_kernel(x_ref, w1_ref, b1_ref, w2_ref, b2_ref, o_ref, *, inv_hw):
    """Single-pass CA for one batch: cov1 -> cov2 -> mean -> sigmoid -> scale.

    x_ref:  (1, C, HW)    one full batch (HW is the lane axis)
    w1_ref: (Cm, C), b1_ref: (Cm, 1)     BN scale already folded into w1
    w2_ref: (C, Cm), b2_ref: (C, 1)      BN scale already folded into w2
    o_ref:  (1, C, HW)
    """
    x = x_ref[0]                                                      # (C, HW)
    h = jnp.dot(w1_ref[...], x, preferred_element_type=jnp.float32)   # (Cm, HW)
    h = h + b1_ref[...]
    h = h * jax.nn.sigmoid(h)                                         # SiLU
    y = jnp.dot(w2_ref[...], h, preferred_element_type=jnp.float32)   # (C, HW)
    y = y + b2_ref[...]
    y = y * jax.nn.sigmoid(y)                                         # SiLU
    w = jax.nn.sigmoid(jnp.sum(y, axis=1, keepdims=True) * inv_hw)    # (C, 1)
    o_ref[...] = (x * w)[None].astype(o_ref.dtype)


def _ca_reduce_kernel(x_ref, w1_ref, b1_ref, w2_ref, b2_ref, wgt_ref,
                      *, hw, thw, inv_hw):
    """Two-pass path, pass 1: fused cov1 -> cov2 -> spatial sum -> sigmoid.

    The (1, C, 1) output block is revisited across the spatial-tile axis and
    used as the accumulator; the final visit converts the sum into the
    per-channel attention weight sigmoid(sum / HW).
    """
    t = pl.program_id(1)

    @pl.when(t == 0)
    def _():
        wgt_ref[...] = jnp.zeros_like(wgt_ref)

    x = x_ref[0]                                                      # (C, thw)
    h = jnp.dot(w1_ref[...], x, preferred_element_type=jnp.float32)   # (Cm, thw)
    h = h + b1_ref[...]
    h = h * jax.nn.sigmoid(h)
    y = jnp.dot(w2_ref[...], h, preferred_element_type=jnp.float32)   # (C, thw)
    y = y + b2_ref[...]
    y = y * jax.nn.sigmoid(y)
    if hw % thw != 0:
        # Ragged last tile: padded columns hold unspecified data and
        # SiLU(bias) is nonzero there, so mask them out of the reduction.
        col = t * thw + jax.lax.broadcasted_iota(jnp.int32, y.shape, 1)
        y = jnp.where(col < hw, y, 0.0)
    wgt_ref[...] += jnp.sum(y, axis=1, keepdims=True)[None]           # (1, C, 1)

    @pl.when(t == pl.num_programs(1) - 1)
    def _():
        wgt_ref[...] = jax.nn.sigmoid(wgt_ref[...] * inv_hw)


def _ca_scale_kernel(x_ref, wgt_ref, o_ref):
    """Two-pass path, pass 2: out = x * weight (pure mem-bound multiply)."""
    o_ref[...] = (x_ref[...] * wgt_ref[...]).astype(o_ref.dtype)


# ------------------------------- CA forward ----------------------------------

def _vmem_capacity_bytes():
    try:
        return int(pltpu.get_tpu_info().vmem_capacity_bytes)
    except Exception:
        return 64 << 20      # conservative fallback (v7x per-core VMEM)


def ca_forward(x_nchw, params):
    """CA forward.  Input/output in NCHW to match PyTorch."""
    B, C, H, W = x_nchw.shape
    HW = H * W
    Cm = params["w1"].shape[0]
    itemsize = 4             # float32 compute path

    x = x_nchw.reshape(B, C, HW)          # free reshape; HW is the lane axis

    capacity = _vmem_capacity_bytes()
    budget = capacity // 2                # leave headroom for compiler scratch

    # Small constant operands (double-buffered by the pipeline).
    const_bytes = 2 * itemsize * (2 * C * Cm + C + Cm)

    # Single-pass working set: x (x2 bufs) + out (x2 bufs) + h + y intermediates.
    fused_bytes = itemsize * HW * (4 * C + Cm + C) + const_bytes

    if fused_bytes <= budget:
        vmem_limit = int(min(capacity - (2 << 20),
                             max(2 * fused_bytes, 32 << 20)))
        out = pl.pallas_call(
            functools.partial(_ca_fused_kernel, inv_hw=1.0 / float(HW)),
            out_shape=jax.ShapeDtypeStruct((B, C, HW), x.dtype),
            grid=(B,),
            in_specs=[
                pl.BlockSpec((1, C, HW), lambda b: (b, 0, 0)),
                pl.BlockSpec((Cm, C), lambda b: (0, 0)),
                pl.BlockSpec((Cm, 1), lambda b: (0, 0)),
                pl.BlockSpec((C, Cm), lambda b: (0, 0)),
                pl.BlockSpec((C, 1), lambda b: (0, 0)),
            ],
            out_specs=pl.BlockSpec((1, C, HW), lambda b: (b, 0, 0)),
            compiler_params=pltpu.CompilerParams(
                dimension_semantics=("parallel",),
                vmem_limit_bytes=vmem_limit),
        )(x, params["w1"], params["b1"], params["w2"], params["b2"])
        return out.reshape(B, C, H, W)

    # ---- Two-pass fallback: one batch of x does not fit the VMEM budget ----
    def reduce_bytes(t):     # kernel A per-step working set
        return itemsize * t * (2 * C + Cm + C) + const_bytes

    def scale_bytes(t):      # kernel B per-step working set
        return itemsize * t * (2 * C + 2 * C) + 4 * itemsize * C

    thw = HW                 # only hit when HW < 128 (tiny) or absurdly large C
    for cand in (4096, 2048, 1024, 512, 256, 128):
        if cand <= HW and max(reduce_bytes(cand), scale_bytes(cand)) <= budget:
            thw = cand
            break
    n_t = pl.cdiv(HW, thw)
    vmem_limit = int(min(capacity - (2 << 20),
                         max(2 * max(reduce_bytes(thw), scale_bytes(thw)),
                             32 << 20)))

    # Pass 1: fused cov1 -> cov2 -> per-batch mean -> sigmoid (x_ never hits HBM).
    weights = pl.pallas_call(
        functools.partial(_ca_reduce_kernel, hw=HW, thw=thw,
                          inv_hw=1.0 / float(HW)),
        out_shape=jax.ShapeDtypeStruct((B, C, 1), jnp.float32),
        grid=(B, n_t),
        in_specs=[
            pl.BlockSpec((1, C, thw), lambda b, t: (b, 0, t)),
            pl.BlockSpec((Cm, C), lambda b, t: (0, 0)),
            pl.BlockSpec((Cm, 1), lambda b, t: (0, 0)),
            pl.BlockSpec((C, Cm), lambda b, t: (0, 0)),
            pl.BlockSpec((C, 1), lambda b, t: (0, 0)),
        ],
        out_specs=pl.BlockSpec((1, C, 1), lambda b, t: (b, 0, 0)),
        compiler_params=pltpu.CompilerParams(
            dimension_semantics=("parallel", "arbitrary"),
            vmem_limit_bytes=vmem_limit),
    )(x, params["w1"], params["b1"], params["w2"], params["b2"])

    # Pass 2: out = x * weight, fully parallel / pipelined, lane-dense stores.
    out = pl.pallas_call(
        _ca_scale_kernel,
        out_shape=jax.ShapeDtypeStruct((B, C, HW), x.dtype),
        grid=(B, n_t),
        in_specs=[
            pl.BlockSpec((1, C, thw), lambda b, t: (b, 0, t)),
            pl.BlockSpec((1, C, 1), lambda b, t: (b, 0, 0)),
        ],
        out_specs=pl.BlockSpec((1, C, thw), lambda b, t: (b, 0, t)),
        compiler_params=pltpu.CompilerParams(
            dimension_semantics=("parallel", "parallel"),
            vmem_limit_bytes=vmem_limit),
    )(x, weights)

    return out.reshape(B, C, H, W)


# ----------------------------- parameter setup ------------------------------

def _fold_bn(gamma, beta, mean, var, eps=1e-3):
    # eps=1e-3 matches the Conv wrapper's nn.BatchNorm2d(eps=0.001).
    scale = gamma / jnp.sqrt(var + eps)
    bias = beta - mean * scale
    return scale[:, None], bias[:, None]     # (Cout, 1) for per-row broadcast


def init_ca_params(key, c, rate=4):
    cm = int(c / rate)
    ks = jax.random.split(key, 10)
    # Conv weights stored as (Cout, Cin) — torch's (Cout, Cin, 1, 1) squeezed.
    w1 = 0.1 * jax.random.normal(ks[0], (cm, c), jnp.float32)
    w2 = 0.1 * jax.random.normal(ks[1], (c, cm), jnp.float32)
    # BatchNorm (eval-mode running stats), deterministic but non-trivial values.
    g1 = 1.0 + 0.1 * jax.random.normal(ks[2], (cm,), jnp.float32)
    b1 = 0.1 * jax.random.normal(ks[3], (cm,), jnp.float32)
    m1 = 0.1 * jax.random.normal(ks[4], (cm,), jnp.float32)
    v1 = 1.0 + 0.1 * jax.random.uniform(ks[5], (cm,), jnp.float32)
    g2 = 1.0 + 0.1 * jax.random.normal(ks[6], (c,), jnp.float32)
    b2 = 0.1 * jax.random.normal(ks[7], (c,), jnp.float32)
    m2 = 0.1 * jax.random.normal(ks[8], (c,), jnp.float32)
    v2 = 1.0 + 0.1 * jax.random.uniform(ks[9], (c,), jnp.float32)
    s1, bb1 = _fold_bn(g1, b1, m1, v1)
    s2, bb2 = _fold_bn(g2, b2, m2, v2)
    # Fold the BN scale directly into the conv weights (done once, for free).
    return dict(w1=w1 * s1, b1=bb1, w2=w2 * s2, b2=bb2)


# ------------------------------ pure-JAX reference ---------------------------

def ca_reference(x_nchw, params):
    B, C, H, W = x_nchw.shape
    x = x_nchw.reshape(B, C, H * W).astype(jnp.float32)
    h = jnp.einsum("oc,bcn->bon", params["w1"], x) + params["b1"][None]
    h = h * jax.nn.sigmoid(h)
    y = jnp.einsum("oc,bcn->bon", params["w2"], h) + params["b2"][None]
    y = y * jax.nn.sigmoid(y)
    w = jax.nn.sigmoid(jnp.mean(y, axis=-1, keepdims=True))   # (B, C, 1)
    return (x * w).reshape(B, C, H, W).astype(x_nchw.dtype)


# ----------------------------------- main ------------------------------------

if __name__ == "__main__":
    key = jax.random.PRNGKey(0)
    kx, kp = jax.random.split(key)

    B, C, H, W = 2, 4, 16, 16          # in_channel=4, rate=4 -> mid_ch=1
    x = jax.random.normal(kx, (B, C, H, W), jnp.float32)
    params = init_ca_params(kp, C, rate=4)

    out = jax.jit(ca_forward)(x, params)
    jax.block_until_ready(out)
    assert out.shape == (B, C, H, W), out.shape

    ref = ca_reference(x, params)
    err = float(jnp.max(jnp.abs(out - ref)))
    assert jnp.allclose(out, ref, rtol=1e-4, atol=1e-4), err
    print("KERNEL_OK")
</pallas_src>

<mosaic_0001>
module attributes {stable_mosaic.version = 11 : i64} {
  func.func @_ca_fused_kernel(%arg0: i32, %arg1: memref<1x4x256xf32, #tpu.memory_space<vmem>>, %arg2: memref<1x4xf32, #tpu.memory_space<vmem>>, %arg3: memref<1x1xf32, #tpu.memory_space<vmem>>, %arg4: memref<4x1xf32, #tpu.memory_space<vmem>>, %arg5: memref<4x1xf32, #tpu.memory_space<vmem>>, %arg6: memref<1x4x256xf32, #tpu.memory_space<vmem>>) attributes {dimension_semantics = [#tpu.dimension_semantics<parallel>], iteration_bounds = array<i64: 2>, scalar_prefetch = 0 : i64, scratch_operands = 0 : i64, tpu.core_type = #tpu.core_type<tc>, window_params = [{transform_indices = @transform_0, window_bounds = array<i64: 1, 4, 256>}, {pipeline_mode = #tpu.pipeline_mode<synchronous>, transform_indices = @transform_1, window_bounds = array<i64: 1, 4>}, {pipeline_mode = #tpu.pipeline_mode<synchronous>, transform_indices = @transform_2, window_bounds = array<i64: 1, 1>}, {pipeline_mode = #tpu.pipeline_mode<synchronous>, transform_indices = @transform_3, window_bounds = array<i64: 4, 1>}, {pipeline_mode = #tpu.pipeline_mode<synchronous>, transform_indices = @transform_4, window_bounds = array<i64: 4, 1>}, {transform_indices = @transform_5, window_bounds = array<i64: 1, 4, 256>}]} {
    %c0 = arith.constant 0 : index
    %c0_0 = arith.constant 0 : index
    %c0_1 = arith.constant 0 : index
    %0 = vector.load %arg1[%c0, %c0_0, %c0_1] : memref<1x4x256xf32, #tpu.memory_space<vmem>>, vector<1x4x256xf32>
    %1 = vector.shape_cast %0 : vector<1x4x256xf32> to vector<4x256xf32>
    %c0_2 = arith.constant 0 : index
    %c0_3 = arith.constant 0 : index
    %2 = vector.load %arg2[%c0_2, %c0_3] : memref<1x4xf32, #tpu.memory_space<vmem>>, vector<1x4xf32>
    %cst = arith.constant dense<0.000000e+00> : vector<1x256xf32>
    %3 = tpu.matmul %2, %1, %cst {dimension_numbers = #tpu.dot_dimension_numbers<[1], [0], [0], [1], [0, 0, 1, 1], [], []>} : vector<1x4xf32>, vector<4x256xf32>, vector<1x256xf32> -> vector<1x256xf32>
    %c0_4 = arith.constant 0 : index
    %c0_5 = arith.constant 0 : index
    %4 = vector.load %arg3[%c0_4, %c0_5] : memref<1x1xf32, #tpu.memory_space<vmem>>, vector<1x1xf32>
    %5 = vector.broadcast %4 : vector<1x1xf32> to vector<1x256xf32>
    %6 = arith.addf %3, %5 : vector<1x256xf32>
    %7 = arith.negf %6 : vector<1x256xf32>
    %8 = math.exp %7 : vector<1x256xf32>
    %cst_6 = arith.constant 1.000000e+00 : f32
    %9 = vector.broadcast %cst_6 : f32 to vector<1x256xf32>
    %10 = arith.addf %9, %8 : vector<1x256xf32>
    %11 = arith.divf %9, %10 : vector<1x256xf32>
    %12 = arith.mulf %6, %11 : vector<1x256xf32>
    %c0_7 = arith.constant 0 : index
    %c0_8 = arith.constant 0 : index
    %13 = vector.load %arg4[%c0_7, %c0_8] : memref<4x1xf32, #tpu.memory_space<vmem>>, vector<4x1xf32>
    %cst_9 = arith.constant dense<0.000000e+00> : vector<4x256xf32>
    %14 = tpu.matmul %13, %12, %cst_9 {dimension_numbers = #tpu.dot_dimension_numbers<[1], [0], [0], [1], [0, 0, 1, 1], [], []>} : vector<4x1xf32>, vector<1x256xf32>, vector<4x256xf32> -> vector<4x256xf32>
    %c0_10 = arith.constant 0 : index
    %c0_11 = arith.constant 0 : index
    %15 = vector.load %arg5[%c0_10, %c0_11] : memref<4x1xf32, #tpu.memory_space<vmem>>, vector<4x1xf32>
    %16 = vector.broadcast %15 : vector<4x1xf32> to vector<4x256xf32>
    %17 = arith.addf %14, %16 : vector<4x256xf32>
    %18 = arith.negf %17 : vector<4x256xf32>
    %19 = math.exp %18 : vector<4x256xf32>
    %cst_12 = arith.constant 1.000000e+00 : f32
    %20 = vector.broadcast %cst_12 : f32 to vector<4x256xf32>
    %21 = arith.addf %20, %19 : vector<4x256xf32>
    %22 = arith.divf %20, %21 : vector<4x256xf32>
    %23 = arith.mulf %17, %22 : vector<4x256xf32>
    %cst_13 = arith.constant dense<0.000000e+00> : vector<4xf32>
    %24 = vector.multi_reduction <add>, %23, %cst_13 [1] : vector<4x256xf32> to vector<4xf32>
    %25 = vector.shape_cast %24 : vector<4xf32> to vector<4x1xf32>
    %cst_14 = arith.constant 3.906250e-03 : f32
    %26 = vector.broadcast %cst_14 : f32 to vector<4x1xf32>
    %27 = arith.mulf %25, %26 : vector<4x1xf32>
    %28 = arith.negf %27 : vector<4x1xf32>
    %29 = math.exp %28 : vector<4x1xf32>
    %cst_15 = arith.constant 1.000000e+00 : f32
    %30 = vector.broadcast %cst_15 : f32 to vector<4x1xf32>
    %31 = arith.addf %30, %29 : vector<4x1xf32>
    %32 = arith.divf %30, %31 : vector<4x1xf32>
    %33 = vector.broadcast %32 : vector<4x1xf32> to vector<4x256xf32>
    %34 = arith.mulf %1, %33 : vector<4x256xf32>
    %35 = vector.shape_cast %34 : vector<4x256xf32> to vector<1x4x256xf32>
    %c0_16 = arith.constant 0 : index
    %c0_17 = arith.constant 0 : index
    %c0_18 = arith.constant 0 : index
    %36 = vector.load %arg6[%c0_16, %c0_17, %c0_18] : memref<1x4x256xf32, #tpu.memory_space<vmem>>, vector<1x4x256xf32>
    tpu.vector_store %arg6[%c0_16, %c0_17, %c0_18], %35 {strides = array<i32>} : memref<1x4x256xf32, #tpu.memory_space<vmem>>, vector<1x4x256xf32>,
    return
  }
  func.func @transform_0(%arg0: i32) -> (i32, i32, i32) {
    %c0_i32 = arith.constant 0 : i32
    %c0_i32_0 = arith.constant 0 : i32
    %c0_i32_1 = arith.constant 0 : i32
    return %arg0, %c0_i32, %c0_i32_0 : i32, i32, i32
  }
  func.func @transform_1(%arg0: i32) -> (i32, i32) {
    %c0_i32 = arith.constant 0 : i32
    %c0_i32_0 = arith.constant 0 : i32
    %c0_i32_1 = arith.constant 0 : i32
    return %c0_i32, %c0_i32_0 : i32, i32
  }
  func.func @transform_2(%arg0: i32) -> (i32, i32) {
    %c0_i32 = arith.constant 0 : i32
    %c0_i32_0 = arith.constant 0 : i32
    %c0_i32_1 = arith.constant 0 : i32
    return %c0_i32, %c0_i32_0 : i32, i32
  }
  func.func @transform_3(%arg0: i32) -> (i32, i32) {
    %c0_i32 = arith.constant 0 : i32
    %c0_i32_0 = arith.constant 0 : i32
    %c0_i32_1 = arith.constant 0 : i32
    return %c0_i32, %c0_i32_0 : i32, i32
  }
  func.func @transform_4(%arg0: i32) -> (i32, i32) {
    %c0_i32 = arith.constant 0 : i32
    %c0_i32_0 = arith.constant 0 : i32
    %c0_i32_1 = arith.constant 0 : i32
    return %c0_i32, %c0_i32_0 : i32, i32
  }
  func.func @transform_5(%arg0: i32) -> (i32, i32, i32) {
    %c0_i32 = arith.constant 0 : i32
    %c0_i32_0 = arith.constant 0 : i32
    %c0_i32_1 = arith.constant 0 : i32
    return %arg0, %c0_i32, %c0_i32_0 : i32, i32, i32
  }
}

</mosaic_0001>

<llo_original>
// kernel: ca_forward.1
$region0: #{ca_forward.1}
  #allocation0 [shape = 'u32[]', space=smem, size = 0x4, offset = 0x4, fixed_abs, tag = 'smem constant byte address 0x4 - core index']
  #allocation1 [shape = 'u32[144,128]{1,0:T(1,128)}', space=vmem, size = 0x12000, scoped, tag = 'internal scratch']
  #allocation2 [shape = 'f32[1,1]{1,0:T(1,128)S(1)}', space=vmem, size = 0x200, scoped, tag = 'scoped memory for ca_forward.1']
  %s0 = inlined_call_operand.vmem [shape: f32[2,4,256], index: 0, kind: input, shape index: {}]
  %s1 = inlined_call_operand.vmem [shape: f32[1,4], index: 1, kind: input, shape index: {}]
  %s2 = inlined_call_operand.<no memory space> [shape: f32[1,1], index: 2, kind: input, shape index: {}]
  %s3 = inlined_call_operand.vmem [shape: f32[4,1], index: 3, kind: input, shape index: {}]
  %s4 = inlined_call_operand.vmem [shape: f32[4,1], index: 4, kind: input, shape index: {}]
  %s5 = inlined_call_operand.vmem [shape: f32[2,4,256], index: 5, kind: output, shape index: {}]
  %s6 = sld [smem:[#allocation0]]
  $region53: #{ca_forward.1} parent=0
    _
  %s8 = ssub.s32 1, %s6
  %s9 = scalar_select 0, %s8, %s6
  %v10 = vstv %s2
  %11 = vst [vmem:[#allocation2] sm:$0x1] %v10
  loop: start=0, step=1, limit=4
  $region2: #{ca_forward.1} parent=0 // loop_pre_header
    _
  $region3: #{ca_forward.1} parent=0 // loop_header
    %s13 = sphi 0, %s17
    %p14 = scmp.ge.s32.totalorder %s13, 4
    %s23 = sphi 0, %s25
    %s26 = sphi 0, %s23
    %s27 = sphi 0, %s26
    %s43 = sphi 0, %s27
    %s47 = sphi 0, %s47
    %s49 = sphi 0, %s47
    %s50 = sphi 0, %s49
    %s64 = sphi 0, %s50
    %s68 = sphi 0, %s68
    %s70 = sphi 0, %s68
    %s71 = sphi 0, %s70
    %s85 = sphi 0, %s71
    %s89 = sphi 0, %s89
    %s91 = sphi 0, %s89
    %s92 = sphi 0, %s91
    %s106 = sphi 0, %s92
    %s110 = sphi 0, %s110
    %s112 = sphi 0, %s110
    %s113 = sphi 0, %s112
    %s127 = sphi 0, %s113
    %s133 = sphi 0, %s135
    %s136 = sphi 0, %s133
    %s137 = sphi 0, %s136
    %s153 = sphi 0, %s137
  $region4: #{ca_forward.1} parent=0 // loop_header_branch
    %16 = sbr.rel (%p14) target = $region8
  $region5: #{ca_forward.1} parent=0 // loop_body
    %s18 = ssub.s32 %s13, 1
    %s19 = ssub.s32 %s13, 2
    %s20 = sadd.s32 %s13, 1
    %s21 = ssub.s32 %s13, %s20
    %p22 = scmp.eq.s32.totalorder %s21, 0
    %s24 = sadd.s32 %s23, 1
    %s25 = scalar_select %p22, %s23, %s24
    %p28 = pneg %p22
    %p29 = scmp.eq.s32.totalorder %s13, 1
    %p30 = por %p28, %p29
    %p31 = scmp.ne.s32.totalorder %s23, %s26
    %p32 = scmp.eq.s32.totalorder %s13, 0
    %p33 = por %p31, %p32
    %p34 = scmp.ne.s32.totalorder %s23, %s26
    %p35 = scmp.eq.s32.totalorder %s18, 1
    %p36 = por %p34, %p35
    %p37 = scmp.ne.s32.totalorder %s26, %s27
    %p38 = scmp.eq.s32.totalorder %s18, 0
    %p39 = por %p37, %p38
    %p40 = scmp.ne.s32.totalorder %s26, %s27
    %p41 = scmp.eq.s32.totalorder %s19, 1
    %p42 = por %p40, %p41
    %p44 = scmp.ne.s32.totalorder %s27, %s43
    %p45 = scmp.eq.s32.totalorder %s19, 0
    %p46 = por %p44, %p45
    %s48 = sadd.s32 %s47, 1
    %p51 = scmp.eq.s32.totalorder %s13, 1
    %p52 = scmp.ne.s32.totalorder %s47, %s49
    %p53 = scmp.eq.s32.totalorder %s13, 0
    %p54 = por %p52, %p53
    %p55 = scmp.ne.s32.totalorder %s47, %s49
    %p56 = scmp.eq.s32.totalorder %s18, 1
    %p57 = por %p55, %p56
    %p58 = scmp.ne.s32.totalorder %s49, %s50
    %p59 = scmp.eq.s32.totalorder %s18, 0
    %p60 = por %p58, %p59
    %p61 = scmp.ne.s32.totalorder %s49, %s50
    %p62 = scmp.eq.s32.totalorder %s19, 1
    %p63 = por %p61, %p62
    %p65 = scmp.ne.s32.totalorder %s50, %s64
    %p66 = scmp.eq.s32.totalorder %s19, 0
    %p67 = por %p65, %p66
    %s69 = sadd.s32 %s68, 1
    %p72 = scmp.eq.s32.totalorder %s13, 1
    %p73 = scmp.ne.s32.totalorder %s68, %s70
    %p74 = scmp.eq.s32.totalorder %s13, 0
    %p75 = por %p73, %p74
    %p76 = scmp.ne.s32.totalorder %s68, %s70
    %p77 = scmp.eq.s32.totalorder %s18, 1
    %p78 = por %p76, %p77
    %p79 = scmp.ne.s32.totalorder %s70, %s71
    %p80 = scmp.eq.s32.totalorder %s18, 0
    %p81 = por %p79, %p80
    %p82 = scmp.ne.s32.totalorder %s70, %s71
    %p83 = scmp.eq.s32.totalorder %s19, 1
    %p84 = por %p82, %p83
    %p86 = scmp.ne.s32.totalorder %s71, %s85
    %p87 = scmp.eq.s32.totalorder %s19, 0
    %p88 = por %p86, %p87
    %s90 = sadd.s32 %s89, 1
    %p93 = scmp.eq.s32.totalorder %s13, 1
    %p94 = scmp.ne.s32.totalorder %s89, %s91
    %p95 = scmp.eq.s32.totalorder %s13, 0
    %p96 = por %p94, %p95
    %p97 = scmp.ne.s32.totalorder %s89, %s91
    %p98 = scmp.eq.s32.totalorder %s18, 1
    %p99 = por %p97, %p98
    %p100 = scmp.ne.s32.totalorder %s91, %s92
    %p101 = scmp.eq.s32.totalorder %s18, 0
    %p102 = por %p100, %p101
    %p103 = scmp.ne.s32.totalorder %s91, %s92
    %p104 = scmp.eq.s32.totalorder %s19, 1
    %p105 = por %p103, %p104
    %p107 = scmp.ne.s32.totalorder %s92, %s106
    %p108 = scmp.eq.s32.totalorder %s19, 0
    %p109 = por %p107, %p108
    %s111 = sadd.s32 %s110, 1
    %p114 = scmp.eq.s32.totalorder %s13, 1
    %p115 = scmp.ne.s32.totalorder %s110, %s112
    %p116 = scmp.eq.s32.totalorder %s13, 0
    %p117 = por %p115, %p116
    %p118 = scmp.ne.s32.totalorder %s110, %s112
    %p119 = scmp.eq.s32.totalorder %s18, 1
    %p120 = por %p118, %p119
    %p121 = scmp.ne.s32.totalorder %s112, %s113
    %p122 = scmp.eq.s32.totalorder %s18, 0
    %p123 = por %p121, %p122
    %p124 = scmp.ne.s32.totalorder %s112, %s113
    %p125 = scmp.eq.s32.totalorder %s19, 1
    %p126 = por %p124, %p125
    %p128 = scmp.ne.s32.totalorder %s113, %s127
    %p129 = scmp.eq.s32.totalorder %s19, 0
    %p130 = por %p128, %p129
    %s131 = ssub.s32 %s13, %s20
    %p132 = scmp.eq.s32.totalorder %s131, 0
    %s134 = sadd.s32 %s133, 1
    %s135 = scalar_select %p132, %s133, %s134
    %p138 = pneg %p132
    %p139 = scmp.eq.s32.totalorder %s13, 1
    %p140 = por %p138, %p139
    %p141 = scmp.ne.s32.totalorder %s133, %s136
    %p142 = scmp.eq.s32.totalorder %s13, 0
    %p143 = por %p141, %p142
    %p144 = scmp.ne.s32.totalorder %s133, %s136
    %p145 = scmp.eq.s32.totalorder %s18, 1
    %p146 = por %p144, %p145
    %p147 = scmp.ne.s32.totalorder %s136, %s137
    %p148 = scmp.eq.s32.totalorder %s18, 0
    %p149 = por %p147, %p148
    %p150 = scmp.ne.s32.totalorder %s136, %s137
    %p151 = scmp.eq.s32.totalorder %s19, 1
    %p152 = por %p150, %p151
    %p154 = scmp.ne.s32.totalorder %s137, %s153
    %p155 = scmp.eq.s32.totalorder %s19, 0
    %p156 = por %p154, %p155
    %p157 = scmp.le.s32.totalorder 1, %s13
    %p158 = scmp.lt.s32.totalorder %s13, 3
    %p159 = pnand %p157, %p158
    %p160 = pneg %p159
    // Predicated region
    $region9: #{ca_forward.1} parent=5 // pred_check
      _
    $region10: #{ca_forward.1} parent=5 // pred_check_branch
      %162 = sbr.rel (%p159) target = $region12
    $region11: #{ca_forward.1} parent=5 // pred_region
      %s163 = ssub.s32 %s13, 1
      // Predicated region
      $region13: #{ca_forward.1} parent=11 // pred_check
        %p164 = pneg %p60
      $region14: #{ca_forward.1} parent=11 // pred_check_branch
        %166 = sbr.rel (%p164) target = $region16
      $region15: #{ca_forward.1} parent=11 // pred_region
        _
      $region16: #{ca_forward.1} parent=11 // pred_fallthru
        _
      // Predicated region
      $region17: #{ca_forward.1} parent=11 // pred_check
        %p167 = pneg %p81
      $region18: #{ca_forward.1} parent=11 // pred_check_branch
        %169 = sbr.rel (%p167) target = $region20
      $region19: #{ca_forward.1} parent=11 // pred_region
        _
      $region20: #{ca_forward.1} parent=11 // pred_fallthru
        _
      // Predicated region
      $region21: #{ca_forward.1} parent=11 // pred_check
        %p170 = pneg %p102
      $region22: #{ca_forward.1} parent=11 // pred_check_branch
        %172 = sbr.rel (%p170) target = $region24
      $region23: #{ca_forward.1} parent=11 // pred_region
        _
      $region24: #{ca_forward.1} parent=11 // pred_fallthru
        _
      // Predicated region
      $region25: #{ca_forward.1} parent=11 // pred_check
        %p173 = pneg %p123
      $region26: #{ca_forward.1} parent=11 // pred_check_branch
        %175 = sbr.rel (%p173) target = $region28
      $region27: #{ca_forward.1} parent=11 // pred_region
        _
      $region28: #{ca_forward.1} parent=11 // pred_fallthru
        _
    $region12: #{ca_forward.1} parent=5 // pred_fallthru
      _
    %p176 = scmp.lt.s32.totalorder %s13, 2
    // Predicated region
    $region29: #{ca_forward.1} parent=5 // pred_check
      %p177 = pneg %p176
    $region30: #{ca_forward.1} parent=5 // pred_check_branch
      %179 = sbr.rel (%p177) target = $region32
    $region31: #{ca_forward.1} parent=5 // pred_region
      // Predicated region
      $region33: #{ca_forward.1} parent=31 // pred_check
        %p180 = pneg %p33
      $region34: #{ca_forward.1} parent=31 // pred_check_branch
        %182 = sbr.rel (%p180) target = $region36
      $region35: #{ca_forward.1} parent=31 // pred_region
        %p183 = scmp.lt.s32.totalorder %s13, 1
        %s184 = scalar_select %p183, %s13, 1
        %s185 = smul.addr %s184, 2
        %s186 = smul.addr %s185, 4
        %s187 = scalar_lea.vmem %s0, %s186
      $region36: #{ca_forward.1} parent=31 // pred_fallthru
        _
    $region32: #{ca_forward.1} parent=5 // pred_fallthru
      _
    %p188 = scmp.le.s32.totalorder 1, %s13
    %p189 = scmp.lt.s32.totalorder %s13, 3
    %p190 = pnand %p188, %p189
    %p191 = pneg %p190
    // Predicated region
    $region37: #{ca_forward.1} parent=5 // pred_check
      _
    $region38: #{ca_forward.1} parent=5 // pred_check_branch
      %193 = sbr.rel (%p190) target = $region40
    $region39: #{ca_forward.1} parent=5 // pred_region
      %s194 = ssub.s32 %s13, 1
      %p195 = scmp.lt.s32.totalorder %s18, 1
      %s196 = scalar_select %p195, %s18, 1
      %s197 = smul.addr %s196, 2
      %s198 = smul.addr %s197, 4
      %s199 = scalar_lea.vmem %s0, %s198
      %p200 = pneg %p39
      %p201 = pneg %p36
      %p202 = pneg %p60
      %p203 = pneg %p57
      %p204 = pneg %p81
      %p205 = pneg %p78
      %p206 = pneg %p102
      %p207 = pneg %p99
      %p208 = pneg %p123
      %p209 = pneg %p120
      %p210 = pneg %p149
      %p211 = pneg %p146
      %p212 = scmp.lt.s32.totalorder %s18, 1
      %s213 = scalar_select %p212, %s18, 1
      %s214 = smul.addr %s213, 2
      %s215 = smul.addr %s214, 4
      %s216 = scalar_lea.vmem %s5, %s215
      %p217 = scmp.lt.s32.totalorder %s18, 1
      %s218 = scalar_select %p217, %s18, 1
      %s219 = smul.addr %s218, 2
      %s220 = smul.addr %s219, 4
      %s221 = scalar_lea.vmem %s0, %s220
      %p222 = scmp.lt.s32.totalorder %s18, 1
      %s223 = scalar_select %p222, %s18, 1
      %s224 = smul.addr %s223, 2
      %s225 = smul.addr %s224, 4
      %s226 = scalar_lea.vmem %s5, %s225
      %v227 = vld [vmem:[%s221] sm:$0xff]
      %v228 = vld [vmem:[%s1] sm:$0x1]
      %v229 = vld [vmem:[#allocation2] sm:$0x1]
      %231 = vset.pattern.permute.xlu0 0
      %232 = vperm.xlu0 %231, %v229
      %v233 = vpop.permute.xlu0 %232
      %v235 = vlaneseq
      %v236 = vshrl.u32 %v235, 7
      %v237 = vsub.s32 0, %v236
      %v238 = vrot.slane %v233, %v237
      %v240 = vcombine.high %v227, %v227
      %vm241 = vcmask 31744
      %v243 = vsel %vm241, %v228, 0
      %vm245 = vcmask 1043456
      %v246 = vsel %vm245, %v227, 0
      %v248 = vsel %vm245, %v240, 0
      %250 = vmatprep.subr.mxu0 %v248
      %251 = vmatpush1.msra.mxu0 %v246
      %252 = vmatprep.subr.mxu0 0.0
      %253 = vmatpush1.msra.mxu0 0.0
      %254 = vmatprep.subr.mxu0 0.0
      %255 = vmatpush1.msra.mxu0 0.0
      %256 = vmatprep.subr.mxu0 0.0
      %257 = vmatpush1.msra.mxu0 0.0
      %258 = vmatprep.subr.mxu0 0.0
      %259 = vmatpush1.msra.mxu0 0.0
      %260 = vmatprep.subr.mxu0 0.0
      %261 = vmatpush1.msra.mxu0 0.0
      %262 = vmatprep.subr.mxu0 0.0
      %263 = vmatpush1.msra.mxu0 0.0
      %264 = vmatprep.subr.mxu0 0.0
      %265 = vmatpush1.msra.mxu0 0.0
      %266 = vmatprep.subr.mxu0 0.0
      %267 = vmatpush1.msra.mxu0 0.0
      %268 = vmatprep.subr.mxu0 0.0
      %269 = vmatpush1.msra.mxu0 0.0
      %270 = vmatprep.subr.mxu0 0.0
      %271 = vmatpush1.msra.mxu0 0.0
      %272 = vmatprep.subr.mxu0 0.0
      %273 = vmatpush1.msra.mxu0 0.0
      %274 = vmatprep.subr.mxu0 0.0
      %275 = vmatpush1.msra.mxu0 0.0
      %276 = vmatprep.subr.mxu0 0.0
      %277 = vmatpush1.msra.mxu0 0.0
      %278 = vmatprep.subr.mxu0 0.0
      %279 = vmatpush1.msra.mxu0 0.0
      %280 = vmatprep.subr.mxu0 0.0
      %281 = vmatpush1.msra.mxu0 0.0
      %282 = vmatprep.subr.mxu0 0.0
      %283 = vmatpush1.msra.mxu0 0.0
      %284 = vmatprep.subr.mxu0 0.0
      %285 = vmatpush1.msra.mxu0 0.0
      %286 = vmatprep.subr.mxu0 0.0
      %287 = vmatpush1.msra.mxu0 0.0
      %288 = vmatprep.subr.mxu0 0.0
      %289 = vmatpush1.msra.mxu0 0.0
      %290 = vmatprep.subr.mxu0 0.0
      %291 = vmatpush1.msra.mxu0 0.0
      %292 = vmatprep.subr.mxu0 0.0
      %293 = vmatpush1.msra.mxu0 0.0
      %294 = vmatprep.subr.mxu0 0.0
      %295 = vmatpush1.msra.mxu0 0.0
      %296 = vmatprep.subr.mxu0 0.0
      %297 = vmatpush1.msra.mxu0 0.0
      %298 = vmatprep.subr.mxu0 0.0
      %299 = vmatpush1.msra.mxu0 0.0
      %300 = vmatprep.subr.mxu0 0.0
      %301 = vmatpush1.msra.mxu0 0.0
      %302 = vmatprep.subr.mxu0 0.0
      %303 = vmatpush1.msra.mxu0 0.0
      %304 = vmatprep.subr.mxu0 0.0
      %305 = vmatpush1.msra.mxu0 0.0
      %306 = vmatprep.subr.mxu0 0.0
      %307 = vmatpush1.msra.mxu0 0.0
      %308 = vmatprep.subr.mxu0 0.0
      %309 = vmatpush1.msra.mxu0 0.0
      %310 = vmatprep.subr.mxu0 0.0
      %311 = vmatpush1.msra.mxu0 0.0
      %312 = vmatprep.subr.mxu0 0.0
      %313 = vmatpush1.msra.mxu0 0.0
      %314 = vmatprep.mubr.f32.mxu0 0.0
      %315 = vmatmul.mubr.f32.gmra.mrb[0].mxu0 %v243
      %v316 = vpop.f32.mrb[0].mxu0
      %v317 = vadd.f32 %v238, %v316
      %v318 = vpop.f32.mrb[0].mxu0
      %v319 = vadd.f32 %v238, %v318
      %320 = vdwg.mxu0
      %v321 = vxor.u32 %v317, 2147483648
      %v322 = vxor.u32 %v319, 2147483648
      %v323 = vmul.f32 %v321, 1.442695
      %v324 = vpow.pop %v323
      %v325 = vmul.f32 %v322, 1.442695
      %v326 = vpow.pop %v325
      %v327 = vadd.f32 %v324, 1.0
      %v328 = vadd.f32 %v326, 1.0
      %v329 = vrcp.pop %v327
      %v330 = vmul.f32 1.0, %v329
      %v331 = vrcp.pop %v328
      %v332 = vmul.f32 1.0, %v331
      %v333 = vmul.f32 %v317, %v330
      %v334 = vmul.f32 %v319, %v332
      %v335 = vld [vmem:[%s3] sm:$0xf]
      %v336 = vld [vmem:[%s4] sm:$0xf]
      %338 = vset.pattern.permute.xlu0 0
      %339 = vperm.xlu0 %338, %v336
      %v340 = vpop.permute.xlu0 %339
      %vm342 = vcmask 7168
      %v344 = vsel %vm342, %v335, 0
      %vm346 = vcmask 1040384
      %v348 = vsel %vm346, %v333, 0
      %v351 = vsel %vm346, %v334, 0
      %353 = vmatprep.subr.mxu0 %v351
      %354 = vmatpush1.msra.mxu0 %v348
      %355 = vmatprep.subr.mxu0 0.0
      %356 = vmatpush1.msra.mxu0 0.0
      %357 = vmatprep.subr.mxu0 0.0
      %358 = vmatpush1.msra.mxu0 0.0
      %359 = vmatprep.subr.mxu0 0.0
      %360 = vmatpush1.msra.mxu0 0.0
      %361 = vmatprep.subr.mxu0 0.0
      %362 = vmatpush1.msra.mxu0 0.0
      %363 = vmatprep.subr.mxu0 0.0
      %364 = vmatpush1.msra.mxu0 0.0
      %365 = vmatprep.subr.mxu0 0.0
      %366 = vmatpush1.msra.mxu0 0.0
      %367 = vmatprep.subr.mxu0 0.0
      %368 = vmatpush1.msra.mxu0 0.0
      %369 = vmatprep.subr.mxu0 0.0
      %370 = vmatpush1.msra.mxu0 0.0
      %371 = vmatprep.subr.mxu0 0.0
      %372 = vmatpush1.msra.mxu0 0.0
      %373 = vmatprep.subr.mxu0 0.0
      %374 = vmatpush1.msra.mxu0 0.0
      %375 = vmatprep.subr.mxu0 0.0
      %376 = vmatpush1.msra.mxu0 0.0
      %377 = vmatprep.subr.mxu0 0.0
      %378 = vmatpush1.msra.mxu0 0.0
      %379 = vmatprep.subr.mxu0 0.0
      %380 = vmatpush1.msra.mxu0 0.0
      %381 = vmatprep.subr.mxu0 0.0
      %382 = vmatpush1.msra.mxu0 0.0
      %383 = vmatprep.subr.mxu0 0.0
      %384 = vmatpush1.msra.mxu0 0.0
      %385 = vmatprep.subr.mxu0 0.0
      %386 = vmatpush1.msra.mxu0 0.0
      %387 = vmatprep.subr.mxu0 0.0
      %388 = vmatpush1.msra.mxu0 0.0
      %389 = vmatprep.subr.mxu0 0.0
      %390 = vmatpush1.msra.mxu0 0.0
      %391 = vmatprep.subr.mxu0 0.0
      %392 = vmatpush1.msra.mxu0 0.0
      %393 = vmatprep.subr.mxu0 0.0
      %394 = vmatpush1.msra.mxu0 0.0
      %395 = vmatprep.subr.mxu0 0.0
      %396 = vmatpush1.msra.mxu0 0.0
      %397 = vmatprep.subr.mxu0 0.0
      %398 = vmatpush1.msra.mxu0 0.0
      %399 = vmatprep.subr.mxu0 0.0
      %400 = vmatpush1.msra.mxu0 0.0
      %401 = vmatprep.subr.mxu0 0.0
      %402 = vmatpush1.msra.mxu0 0.0
      %403 = vmatprep.subr.mxu0 0.0
      %404 = vmatpush1.msra.mxu0 0.0
      %405 = vmatprep.subr.mxu0 0.0
      %406 = vmatpush1.msra.mxu0 0.0
      %407 = vmatprep.subr.mxu0 0.0
      %408 = vmatpush1.msra.mxu0 0.0
      %409 = vmatprep.subr.mxu0 0.0
      %410 = vmatpush1.msra.mxu0 0.0
      %411 = vmatprep.subr.mxu0 0.0
      %412 = vmatpush1.msra.mxu0 0.0
      %413 = vmatprep.subr.mxu0 0.0
      %414 = vmatpush1.msra.mxu0 0.0
      %415 = vmatprep.subr.mxu0 0.0
      %416 = vmatpush1.msra.mxu0 0.0
      %417 = vmatprep.mubr.f32.mxu0 0.0
      %418 = vmatmul.mubr.f32.gmra.mrb[0].mxu0 %v344
      %v419 = vpop.f32.mrb[0].mxu0
      %v420 = vadd.f32 %v340, %v419
      %v421 = vpop.f32.mrb[0].mxu0
      %v422 = vadd.f32 %v340, %v421
      %423 = vdwg.mxu0
      %v424 = vxor.u32 %v420, 2147483648
      %v425 = vxor.u32 %v422, 2147483648
      %v426 = vmul.f32 %v424, 1.442695
      %v427 = vpow.pop %v426
      %v428 = vmul.f32 %v425, 1.442695
      %v429 = vpow.pop %v428
      %v430 = vadd.f32 %v427, 1.0
      %v431 = vadd.f32 %v429, 1.0
      %v432 = vrcp.pop %v430
      %v433 = vmul.f32 1.0, %v432
      %v434 = vrcp.pop %v431
      %v435 = vmul.f32 1.0, %v434
      %v436 = vmul.f32 %v420, %v433
      %v437 = vmul.f32 %v422, %v435
      %v438 = vsel %vm245, %v436, 0.0
      %v439 = vsel %vm245, %v437, 0.0
      %v440 = vadd.f32 %v438, %v439
      %441 = vadd.xlane.f32.xlu0 %v440
      %v442 = vpop.xlane.xlu0 %441
      %v443 = vmul.f32 %v442, 0.00390625
      %v444 = vxor.u32 %v443, 2147483648
      %v445 = vmul.f32 %v444, 1.442695
      %v446 = vpow.pop %v445
      %v447 = vadd.f32 %v446, 1.0
      %v448 = vrcp.pop %v447
      %v449 = vmul.f32 1.0, %v448
      %v452 = vunpack.c.l.s4 839922192
      %v453 = vunpack.c.0.s8 %v452
      %v454 = vlaneseq
      %v455 = vshrl.u32 %v454, 7
      %v456 = vsub.s32 %v453, %v455
      %v457 = vrot.slane %v449, %v456
      %v459 = vmul.f32 %v227, %v457
      %460 = vst [vmem:[%s226] sm:$0xff] %v459
      %p461 = scmp.lt.s32.totalorder %s18, 1
      %s462 = scalar_select %p461, %s18, 1
      %s463 = smul.addr %s462, 2
      %s464 = smul.addr %s463, 4
      %s465 = scalar_lea.vmem %s5, %s464
      // Predicated region
      $region41: #{ca_forward.1} parent=39 // pred_check
        %p466 = pneg %p146
      $region42: #{ca_forward.1} parent=39 // pred_check_branch
        %468 = sbr.rel (%p466) target = $region44
      $region43: #{ca_forward.1} parent=39 // pred_region
        _
      $region44: #{ca_forward.1} parent=39 // pred_fallthru
        _
    $region40: #{ca_forward.1} parent=5 // pred_fallthru
      _
    %p469 = scmp.le.s32.totalorder 2, %s13
    // Predicated region
    $region45: #{ca_forward.1} parent=5 // pred_check
      %p470 = pneg %p469
    $region46: #{ca_forward.1} parent=5 // pred_check_branch
      %472 = sbr.rel (%p470) target = $region48
    $region47: #{ca_forward.1} parent=5 // pred_region
      %s473 = ssub.s32 %s13, 2
      // Predicated region
      $region49: #{ca_forward.1} parent=47 // pred_check
        %p474 = pneg %p152
      $region50: #{ca_forward.1} parent=47 // pred_check_branch
        %476 = sbr.rel (%p474) target = $region52
      $region51: #{ca_forward.1} parent=47 // pred_region
        %p477 = scmp.lt.s32.totalorder %s19, 1
        %s478 = scalar_select %p477, %s19, 1
        %s479 = smul.addr %s478, 2
        %s480 = smul.addr %s479, 4
        %s481 = scalar_lea.vmem %s5, %s480
      $region52: #{ca_forward.1} parent=47 // pred_fallthru
        _
    $region48: #{ca_forward.1} parent=5 // pred_fallthru
      _
  $region6: #{ca_forward.1} parent=0 // loop_footer
    %s17 = sadd.s32 1, %s13
  $region7: #{ca_forward.1} parent=0 // loop_footer_branch
    %12 = sbr.rel target = $region3
  $region8: #{ca_forward.1} parent=0 // loop_exit
    _

</llo_original>
